<compile_context>
chip_gen: v7x
topology: tpu7x:2x2x1
jax: 0.10.0
libtpu: 0.0.40
codegen_flags: <defaults>
</compile_context>

<pallas_src>
import math
import functools

import jax
import jax.numpy as jnp
from jax.experimental import pallas as pl
from jax.experimental.pallas import tpu as pltpu

_TWO_PI = 2.0 * math.pi


def _learned_sinusoidal_kernel(x_ref, w_ref, o_ref, *, flip_sin_to_cos):
    # x_ref: (1, TB)   w_ref: (half_dim, 1)   o_ref: (1 + 2*half_dim, TB)
    x = x_ref[...]                          # (1, TB), batch on lanes
    w_scaled = w_ref[...] * _TWO_PI         # (half_dim, 1), once per tile
    freqs = w_scaled * x                    # (half_dim, TB) VPU broadcast mul
    s = jnp.sin(freqs)                      # EUP
    c = jnp.cos(freqs)                      # EUP
    first, second = (c, s) if flip_sin_to_cos else (s, c)
    # One unmasked, lane-dense full-block store: rows are [x | first | second].
    o_ref[...] = jnp.concatenate([x, first, second], axis=0)


def learned_sinusoidal_pos_emb(x, weights, *, flip_sin_to_cos=False, lane_tile=1024):
    """x: (B,) float, weights: (half_dim,) float -> (B, 1 + 2*half_dim) float32."""
    assert x.ndim == 1
    assert weights.ndim == 1
    b = x.shape[0]
    half_dim = weights.shape[0]
    out_dim = 1 + 2 * half_dim

    # Pad batch so every lane tile is full and a multiple of 128 lanes.
    b_pad = ((b + 127) // 128) * 128
    tb = min(lane_tile, b_pad)               # both are multiples of 128
    b_pad = ((b_pad + tb - 1) // tb) * tb
    grid = (b_pad // tb,)

    x_t = jnp.zeros((1, b_pad), jnp.float32).at[0, :b].set(x.astype(jnp.float32))
    w_t = weights.astype(jnp.float32).reshape(half_dim, 1)

    kernel = functools.partial(
        _learned_sinusoidal_kernel, flip_sin_to_cos=flip_sin_to_cos
    )

    out_t = pl.pallas_call(
        kernel,
        out_shape=jax.ShapeDtypeStruct((out_dim, b_pad), jnp.float32),
        grid=grid,
        in_specs=[
            pl.BlockSpec((1, tb), lambda i: (0, i)),          # lane-dense x tile
            pl.BlockSpec((half_dim, 1), lambda i: (0, 0)),    # weights, resident
        ],
        out_specs=pl.BlockSpec((out_dim, tb), lambda i: (0, i)),
        compiler_params=pltpu.CompilerParams(
            dimension_semantics=("parallel",),     # shard lane tiles across TCs
            vmem_limit_bytes=32 * 1024 * 1024,     # explicit, portable budget
        ),
    )(x_t, w_t)

    # Back to the module's (B, 1 + dim) layout (layout plumbing in the wrapper).
    return out_t[:, :b].T


def reference(x, weights, *, flip_sin_to_cos=False):
    """Pure-JAX reference matching the PyTorch forward."""
    half_dim = weights.shape[0]
    x2 = x[:, None].astype(jnp.float32)
    freqs = x2 * weights[None, :].astype(jnp.float32) * 2.0 * math.pi
    fouriered = jnp.concatenate([jnp.sin(freqs), jnp.cos(freqs)], axis=-1)
    if flip_sin_to_cos:
        fouriered = jnp.concatenate(
            [fouriered[:, half_dim:], fouriered[:, :half_dim]], axis=-1
        )
    return jnp.concatenate([x2, fouriered], axis=-1)


if __name__ == "__main__":
    key = jax.random.PRNGKey(0)
    k_x, k_w = jax.random.split(key)

    dim = 32                     # module's `dim` (must be even)
    scale = 1.0
    half_dim = dim // 2

    # Deterministic parameter init: weights = randn(half_dim) * scale
    weights = jax.random.normal(k_w, (half_dim,), dtype=jnp.float32) * scale

    for batch in (8, 300):       # small case + a non-multiple-of-128 case
        x = jax.random.uniform(k_x, (batch,), dtype=jnp.float32) * 10.0
        for flip in (False, True):
            out = learned_sinusoidal_pos_emb(x, weights, flip_sin_to_cos=flip)
            out = jax.block_until_ready(out)
            ref = reference(x, weights, flip_sin_to_cos=flip)
            assert out.shape == (batch, 1 + dim), out.shape
            assert jnp.allclose(out, ref, atol=1e-4, rtol=1e-5), "mismatch vs reference"

    print("KERNEL_OK")
</pallas_src>

<mosaic_0001>
module attributes {stable_mosaic.version = 11 : i64} {
  func.func @_learned_sinusoidal_kernel(%arg0: i32, %arg1: memref<1x128xf32, #tpu.memory_space<vmem>>, %arg2: memref<16x1xf32, #tpu.memory_space<vmem>>, %arg3: memref<33x128xf32, #tpu.memory_space<vmem>>) attributes {dimension_semantics = [#tpu.dimension_semantics<parallel>], iteration_bounds = array<i64: 1>, scalar_prefetch = 0 : i64, scratch_operands = 0 : i64, tpu.core_type = #tpu.core_type<tc>, window_params = [{transform_indices = @transform_0, window_bounds = array<i64: 1, 128>}, {pipeline_mode = #tpu.pipeline_mode<synchronous>, transform_indices = @transform_1, window_bounds = array<i64: 16, 1>}, {transform_indices = @transform_2, window_bounds = array<i64: 33, 128>}]} {
    %c0 = arith.constant 0 : index
    %c0_0 = arith.constant 0 : index
    %0 = vector.load %arg1[%c0, %c0_0] : memref<1x128xf32, #tpu.memory_space<vmem>>, vector<1x128xf32>
    %c0_1 = arith.constant 0 : index
    %c0_2 = arith.constant 0 : index
    %1 = vector.load %arg2[%c0_1, %c0_2] : memref<16x1xf32, #tpu.memory_space<vmem>>, vector<16x1xf32>
    %cst = arith.constant 6.28318548 : f32
    %2 = vector.broadcast %cst : f32 to vector<16x1xf32>
    %3 = arith.mulf %1, %2 : vector<16x1xf32>
    %4 = vector.broadcast %3 : vector<16x1xf32> to vector<16x128xf32>
    %5 = vector.broadcast %0 : vector<1x128xf32> to vector<16x128xf32>
    %6 = arith.mulf %4, %5 : vector<16x128xf32>
    %7 = math.sin %6 : vector<16x128xf32>
    %8 = math.cos %6 : vector<16x128xf32>
    %9 = tpu.concatenate %0, %7, %8 in 0 : vector<1x128xf32>, vector<16x128xf32>, vector<16x128xf32> -> vector<33x128xf32>
    %c0_3 = arith.constant 0 : index
    %c0_4 = arith.constant 0 : index
    %10 = vector.load %arg3[%c0_3, %c0_4] : memref<33x128xf32, #tpu.memory_space<vmem>>, vector<33x128xf32>
    tpu.vector_store %arg3[%c0_3, %c0_4], %9 {strides = array<i32>} : memref<33x128xf32, #tpu.memory_space<vmem>>, vector<33x128xf32>,
    return
  }
  func.func @transform_0(%arg0: i32) -> (i32, i32) {
    %c0_i32 = arith.constant 0 : i32
    %c0_i32_0 = arith.constant 0 : i32
    return %c0_i32, %arg0 : i32, i32
  }
  func.func @transform_1(%arg0: i32) -> (i32, i32) {
    %c0_i32 = arith.constant 0 : i32
    %c0_i32_0 = arith.constant 0 : i32
    %c0_i32_1 = arith.constant 0 : i32
    return %c0_i32, %c0_i32_0 : i32, i32
  }
  func.func @transform_2(%arg0: i32) -> (i32, i32) {
    %c0_i32 = arith.constant 0 : i32
    %c0_i32_0 = arith.constant 0 : i32
    return %c0_i32, %arg0 : i32, i32
  }
}

</mosaic_0001>

<llo_original>
// kernel: tpu_custom_call.1
$region0: #{tpu_custom_call.1}
  #allocation0 [shape = 'u32[]', space=smem, size = 0x4, offset = 0x4, fixed_abs, tag = 'smem constant byte address 0x4 - core index']
  #allocation1 [shape = 'u32[144,128]{1,0:T(1,128)}', space=vmem, size = 0x12000, scoped, tag = 'internal scratch']
  %s0 = inlined_call_operand.vmem [shape: f32[1,128], index: 0, kind: input, shape index: {}]
  %s1 = inlined_call_operand.vmem [shape: f32[16,1], index: 1, kind: input, shape index: {}]
  %s2 = inlined_call_operand.hbm [shape: f32[33,128], index: 2, kind: output, shape index: {}]
  %s3 = sld [smem:[#allocation0]]
  $region18: #{tpu_custom_call.1} parent=0
    _
  %s5 = ssub.s32 1, %s3
  %s6 = scalar_select 0, %s5, %s3
  $region1: #{tpu_custom_call.1} parent=0
    #allocation2 [shape = 'u8[20480]{0}', space=vmem, size = 0x5000, scoped, tag = 'output window, operand 0, single buffered']
    #allocation3 [shape = 's32[1]{0}', space=sflag, size = 0x4, scoped, tag = 'scoped memory for tpu_custom_call.1']
    %7 = vsyncpa [#allocation3], 0
    // Predicated region
    $region2: #{tpu_custom_call.1} parent=1 // pred_check
      _
    $region3: #{tpu_custom_call.1} parent=1 // pred_check_branch
      %9 = sbr.rel (0) target = $region5
    $region4: #{tpu_custom_call.1} parent=1 // pred_region
      _
    $region5: #{tpu_custom_call.1} parent=1 // pred_fallthru
      _
    // Predicated region
    $region6: #{tpu_custom_call.1} parent=1 // pred_check
      _
    $region7: #{tpu_custom_call.1} parent=1 // pred_check_branch
      %11 = sbr.rel (0) target = $region9
    $region8: #{tpu_custom_call.1} parent=1 // pred_region
      _
    $region9: #{tpu_custom_call.1} parent=1 // pred_fallthru
      _
    %v12 = vld [vmem:[%s0] sm:$0x1]
    %v13 = vld [vmem:[%s1] sm:$0xff]
    %v14 = vld [vmem:[%s1 + $0x8] sm:$0xff]
    %v15 = vmul.f32 %v13, 6.2831855
    %v16 = vmul.f32 %v14, 6.2831855
    %18 = vset.pattern.permute.xlu0 0
    %19 = vperm.xlu0 %18, %v15
    %v20 = vpop.permute.xlu0 %19
    %23 = vset.pattern.permute.xlu0 0
    %24 = vperm.xlu0 %23, %v16
    %v25 = vpop.permute.xlu0 %24
    %v28 = vlaneseq
    %v29 = vshrl.u32 %v28, 7
    %v30 = vsub.s32 0, %v29
    %v31 = vrot.slane %v12, %v30
    %v33 = vmul.f32 %v20, %v31
    %v34 = vmul.f32 %v25, %v31
    %v35 = vand.u32 2147483647, %v33
    %vm36 = vcmp.le.f32.partialorder %v35, 0.7853982
    %vm37 = vcmp.lt.s32.totalorder %v33, 0
    %v38 = vand.u32 %v33, 2139095040
    %v39 = vshrl.u32 %v38, 23
    %v40 = vsub.s32 %v39, 127
    %v41 = vand.u32 2147483647, %v33
    %v42 = vand.u32 %v41, 8388607
    %v43 = vor.u32 %v42, 8388608
    %v44 = vsub.s32 0, %v43
    %v45 = vadd.s32 %v40, 1
    %vm46 = vcmp.gt.s32.totalorder %v45, 0
    %v47 = vsel %vm46, %v45, 0
    %v48 = vshrl.u32 %v47, 5
    %v49 = vand.u32 %v47, 31
    %v50 = vsub.s32 32, %v49
    %v51 = vshrl.u32 683565275, %v50
    %v52 = vshll.u32 683565275, %v49
    %v53 = vshrl.u32 2475754826, %v50
    %v54 = vor.u32 %v52, %v53
    %v55 = vshll.u32 2475754826, %v49
    %v56 = vshrl.u32 2131351028, %v50
    %v57 = vor.u32 %v55, %v56
    %v58 = vshll.u32 2131351028, %v49
    %v59 = vshrl.u32 2102212464, %v50
    %v60 = vor.u32 %v58, %v59
    %v61 = vshll.u32 2102212464, %v49
    %v62 = vshrl.u32 920167782, %v50
    %v63 = vor.u32 %v61, %v62
    %v64 = vshll.u32 920167782, %v49
    %v65 = vshrl.u32 1326507024, %v50
    %v66 = vor.u32 %v64, %v65
    %vm67 = vcmp.lt.s32.totalorder %v48, 1
    %vm68 = vcmp.lt.s32.totalorder %v48, 2
    %vm69 = vcmp.lt.s32.totalorder %v48, 3
    %vm70 = vcmp.lt.s32.totalorder %v48, 4
    %v71 = vsel %vm67, %v51, %v54
    %v72 = vsel %vm70, %v60, 2102212464
    %v73 = vsel %vm69, %v57, %v72
    %v74 = vsel %vm68, %v71, %v73
    %v75 = vsel %vm67, %v54, %v57
    %v76 = vsel %vm70, %v63, 920167782
    %v77 = vsel %vm69, %v60, %v76
    %v78 = vsel %vm68, %v75, %v77
    %v79 = vsel %vm67, %v57, %v60
    %v80 = vsel %vm70, %v66, 1326507024
    %v81 = vsel %vm69, %v63, %v80
    %v82 = vsel %vm68, %v79, %v81
    %v83 = vshll.u32 %v43, 8
    %v84 = vmul.u32.u64.compose %v83, %v82
    %v85 = vextract.low.u32 %v84
    %v86 = vextract.high.u32 %v84
    %v87 = vmul.u32.u64.compose %v83, %v78
    %v88 = vextract.low.u32 %v87
    %v89 = vextract.high.u32 %v87
    %v90 = vmul.u32 %v83, %v74
    %v91 = vadd.s32 %v86, %v88
    %vm92 = vc.u32 %v86, %v88
    %v93 = vadd.s32 %v89, 1
    %v94 = vsel %vm92, %v93, %v89
    %v95 = vadd.s32 %v90, %v94
    %v96 = vadd.s32 %v95, 536870912
    %v97 = vshrl.u32 %v96, 30
    %v98 = vshll.u32 %v97, 30
    %v99 = vsub.s32 %v95, %v98
    %vm100 = vcmp.lt.s32.totalorder %v99, 0
    %v101 = vsub.s32 0, %v99
    %v102 = vsel %vm100, %v101, %v99
    %v103 = vclz %v102
    %v104 = vsub.s32 %v103, 2
    %vm105 = vcmp.gt.s32.totalorder 0, %v104
    %v106 = vsel %vm105, 0, %v104
    %v107 = vsub.s32 32, %v106
    %v108 = vshll.u32 %v99, %v106
    %v109 = vshrl.u32 %v91, %v107
    %v110 = vor.u32 %v108, %v109
    %v111 = vsub.s32 4294967266, %v106
    %v112 = vadd.s32 %v111, 127
    %v113 = vshll.u32 %v112, 23
    %v114 = vor.u32 4788187, %v113
    %v115 = vand.u32 2147483647, %v114
    %v117 = vcvt.s32.f32 %v110
    %v118 = vmul.f32 %v117, %v115
    %v119 = vxor.u32 %v118, 2147483648
    %v120 = vsel %vm37, %v119, %v118
    %v121 = vsub.s32 4, %v97
    %v122 = vsel %vm37, %v121, %v97
    %v123 = vsel %vm36, %v33, %v120
    %v124 = vsel %vm36, 0, %v122
    %v125 = vcosq.f32.pop %v123
    %v126 = vsinq.f32.pop %v123
    %vm127 = vweird.f32 %v33
    %v128 = vadd.s32 %v124, 3
    %v129 = vand.u32 %v128, 3
    %vm130 = vcmp.lt.s32.totalorder %v129, 2
    %vm131 = vcmp.eq.s32.totalorder %v129, 0
    %v132 = vxor.u32 %v126, 2147483648
    %v133 = vsel %vm131, %v125, %v132
    %vm134 = vcmp.eq.s32.totalorder %v129, 2
    %v135 = vxor.u32 %v125, 2147483648
    %v136 = vsel %vm134, %v135, %v126
    %v137 = vsel %vm130, %v133, %v136
    %v138 = vsel %vm127, nan, %v137
    %v139 = vand.u32 2147483647, %v34
    %vm140 = vcmp.le.f32.partialorder %v139, 0.7853982
    %vm141 = vcmp.lt.s32.totalorder %v34, 0
    %v142 = vand.u32 %v34, 2139095040
    %v143 = vshrl.u32 %v142, 23
    %v144 = vsub.s32 %v143, 127
    %v145 = vand.u32 2147483647, %v34
    %v146 = vand.u32 %v145, 8388607
    %v147 = vor.u32 %v146, 8388608
    %v148 = vsub.s32 0, %v147
    %v149 = vadd.s32 %v144, 1
    %vm150 = vcmp.gt.s32.totalorder %v149, 0
    %v151 = vsel %vm150, %v149, 0
    %v152 = vshrl.u32 %v151, 5
    %v153 = vand.u32 %v151, 31
    %v154 = vsub.s32 32, %v153
    %v155 = vshrl.u32 683565275, %v154
    %v156 = vshll.u32 683565275, %v153
    %v157 = vshrl.u32 2475754826, %v154
    %v158 = vor.u32 %v156, %v157
    %v159 = vshll.u32 2475754826, %v153
    %v160 = vshrl.u32 2131351028, %v154
    %v161 = vor.u32 %v159, %v160
    %v162 = vshll.u32 2131351028, %v153
    %v163 = vshrl.u32 2102212464, %v154
    %v164 = vor.u32 %v162, %v163
    %v165 = vshll.u32 2102212464, %v153
    %v166 = vshrl.u32 920167782, %v154
    %v167 = vor.u32 %v165, %v166
    %v168 = vshll.u32 920167782, %v153
    %v169 = vshrl.u32 1326507024, %v154
    %v170 = vor.u32 %v168, %v169
    %vm171 = vcmp.lt.s32.totalorder %v152, 1
    %vm172 = vcmp.lt.s32.totalorder %v152, 2
    %vm173 = vcmp.lt.s32.totalorder %v152, 3
    %vm174 = vcmp.lt.s32.totalorder %v152, 4
    %v175 = vsel %vm171, %v155, %v158
    %v176 = vsel %vm174, %v164, 2102212464
    %v177 = vsel %vm173, %v161, %v176
    %v178 = vsel %vm172, %v175, %v177
    %v179 = vsel %vm171, %v158, %v161
    %v180 = vsel %vm174, %v167, 920167782
    %v181 = vsel %vm173, %v164, %v180
    %v182 = vsel %vm172, %v179, %v181
    %v183 = vsel %vm171, %v161, %v164
    %v184 = vsel %vm174, %v170, 1326507024
    %v185 = vsel %vm173, %v167, %v184
    %v186 = vsel %vm172, %v183, %v185
    %v187 = vshll.u32 %v147, 8
    %v188 = vmul.u32.u64.compose %v187, %v186
    %v189 = vextract.low.u32 %v188
    %v190 = vextract.high.u32 %v188
    %v191 = vmul.u32.u64.compose %v187, %v182
    %v192 = vextract.low.u32 %v191
    %v193 = vextract.high.u32 %v191
    %v194 = vmul.u32 %v187, %v178
    %v195 = vadd.s32 %v190, %v192
    %vm196 = vc.u32 %v190, %v192
    %v197 = vadd.s32 %v193, 1
    %v198 = vsel %vm196, %v197, %v193
    %v199 = vadd.s32 %v194, %v198
    %v200 = vadd.s32 %v199, 536870912
    %v201 = vshrl.u32 %v200, 30
    %v202 = vshll.u32 %v201, 30
    %v203 = vsub.s32 %v199, %v202
    %vm204 = vcmp.lt.s32.totalorder %v203, 0
    %v205 = vsub.s32 0, %v203
    %v206 = vsel %vm204, %v205, %v203
    %v207 = vclz %v206
    %v208 = vsub.s32 %v207, 2
    %vm209 = vcmp.gt.s32.totalorder 0, %v208
    %v210 = vsel %vm209, 0, %v208
    %v211 = vsub.s32 32, %v210
    %v212 = vshll.u32 %v203, %v210
    %v213 = vshrl.u32 %v195, %v211
    %v214 = vor.u32 %v212, %v213
    %v215 = vsub.s32 4294967266, %v210
    %v216 = vadd.s32 %v215, 127
    %v217 = vshll.u32 %v216, 23
    %v218 = vor.u32 4788187, %v217
    %v219 = vand.u32 2147483647, %v218
    %v221 = vcvt.s32.f32 %v214
    %v222 = vmul.f32 %v221, %v219
    %v223 = vxor.u32 %v222, 2147483648
    %v224 = vsel %vm141, %v223, %v222
    %v225 = vsub.s32 4, %v201
    %v226 = vsel %vm141, %v225, %v201
    %v227 = vsel %vm140, %v34, %v224
    %v228 = vsel %vm140, 0, %v226
    %v229 = vcosq.f32.pop %v227
    %v230 = vsinq.f32.pop %v227
    %vm231 = vweird.f32 %v34
    %v232 = vadd.s32 %v228, 3
    %v233 = vand.u32 %v232, 3
    %vm234 = vcmp.lt.s32.totalorder %v233, 2
    %vm235 = vcmp.eq.s32.totalorder %v233, 0
    %v236 = vxor.u32 %v230, 2147483648
    %v237 = vsel %vm235, %v229, %v236
    %vm238 = vcmp.eq.s32.totalorder %v233, 2
    %v239 = vxor.u32 %v229, 2147483648
    %v240 = vsel %vm238, %v239, %v230
    %v241 = vsel %vm234, %v237, %v240
    %v242 = vsel %vm231, nan, %v241
    %v243 = vand.u32 2147483647, %v33
    %vm244 = vcmp.le.f32.partialorder %v243, 0.7853982
    %vm245 = vcmp.lt.s32.totalorder %v33, 0
    %v246 = vand.u32 %v33, 2139095040
    %v247 = vshrl.u32 %v246, 23
    %v248 = vsub.s32 %v247, 127
    %v249 = vand.u32 2147483647, %v33
    %v250 = vand.u32 %v249, 8388607
    %v251 = vor.u32 %v250, 8388608
    %v252 = vsub.s32 0, %v251
    %v253 = vadd.s32 %v248, 1
    %vm254 = vcmp.gt.s32.totalorder %v253, 0
    %v255 = vsel %vm254, %v253, 0
    %v256 = vshrl.u32 %v255, 5
    %v257 = vand.u32 %v255, 31
    %v258 = vsub.s32 32, %v257
    %v259 = vshrl.u32 683565275, %v258
    %v260 = vshll.u32 683565275, %v257
    %v261 = vshrl.u32 2475754826, %v258
    %v262 = vor.u32 %v260, %v261
    %v263 = vshll.u32 2475754826, %v257
    %v264 = vshrl.u32 2131351028, %v258
    %v265 = vor.u32 %v263, %v264
    %v266 = vshll.u32 2131351028, %v257
    %v267 = vshrl.u32 2102212464, %v258
    %v268 = vor.u32 %v266, %v267
    %v269 = vshll.u32 2102212464, %v257
    %v270 = vshrl.u32 920167782, %v258
    %v271 = vor.u32 %v269, %v270
    %v272 = vshll.u32 920167782, %v257
    %v273 = vshrl.u32 1326507024, %v258
    %v274 = vor.u32 %v272, %v273
    %vm275 = vcmp.lt.s32.totalorder %v256, 1
    %vm276 = vcmp.lt.s32.totalorder %v256, 2
    %vm277 = vcmp.lt.s32.totalorder %v256, 3
    %vm278 = vcmp.lt.s32.totalorder %v256, 4
    %v279 = vsel %vm275, %v259, %v262
    %v280 = vsel %vm278, %v268, 2102212464
    %v281 = vsel %vm277, %v265, %v280
    %v282 = vsel %vm276, %v279, %v281
    %v283 = vsel %vm275, %v262, %v265
    %v284 = vsel %vm278, %v271, 920167782
    %v285 = vsel %vm277, %v268, %v284
    %v286 = vsel %vm276, %v283, %v285
    %v287 = vsel %vm275, %v265, %v268
    %v288 = vsel %vm278, %v274, 1326507024
    %v289 = vsel %vm277, %v271, %v288
    %v290 = vsel %vm276, %v287, %v289
    %v291 = vshll.u32 %v251, 8
    %v292 = vmul.u32.u64.compose %v291, %v290
    %v293 = vextract.low.u32 %v292
    %v294 = vextract.high.u32 %v292
    %v295 = vmul.u32.u64.compose %v291, %v286
    %v296 = vextract.low.u32 %v295
    %v297 = vextract.high.u32 %v295
    %v298 = vmul.u32 %v291, %v282
    %v299 = vadd.s32 %v294, %v296
    %vm300 = vc.u32 %v294, %v296
    %v301 = vadd.s32 %v297, 1
    %v302 = vsel %vm300, %v301, %v297
    %v303 = vadd.s32 %v298, %v302
    %v304 = vadd.s32 %v303, 536870912
    %v305 = vshrl.u32 %v304, 30
    %v306 = vshll.u32 %v305, 30
    %v307 = vsub.s32 %v303, %v306
    %vm308 = vcmp.lt.s32.totalorder %v307, 0
    %v309 = vsub.s32 0, %v307
    %v310 = vsel %vm308, %v309, %v307
    %v311 = vclz %v310
    %v312 = vsub.s32 %v311, 2
    %vm313 = vcmp.gt.s32.totalorder 0, %v312
    %v314 = vsel %vm313, 0, %v312
    %v315 = vsub.s32 32, %v314
    %v316 = vshll.u32 %v307, %v314
    %v317 = vshrl.u32 %v299, %v315
    %v318 = vor.u32 %v316, %v317
    %v319 = vsub.s32 4294967266, %v314
    %v320 = vadd.s32 %v319, 127
    %v321 = vshll.u32 %v320, 23
    %v322 = vor.u32 4788187, %v321
    %v323 = vand.u32 2147483647, %v322
    %v325 = vcvt.s32.f32 %v318
    %v326 = vmul.f32 %v325, %v323
    %v327 = vxor.u32 %v326, 2147483648
    %v328 = vsel %vm245, %v327, %v326
    %v329 = vsub.s32 4, %v305
    %v330 = vsel %vm245, %v329, %v305
    %v331 = vsel %vm244, %v33, %v328
    %v332 = vsel %vm244, 0, %v330
    %v333 = vcosq.f32.pop %v331
    %v334 = vsinq.f32.pop %v331
    %vm335 = vweird.f32 %v33
    %v336 = vand.u32 %v332, 3
    %vm337 = vcmp.lt.s32.totalorder %v336, 2
    %vm338 = vcmp.eq.s32.totalorder %v336, 0
    %v339 = vxor.u32 %v334, 2147483648
    %v340 = vsel %vm338, %v333, %v339
    %vm341 = vcmp.eq.s32.totalorder %v336, 2
    %v342 = vxor.u32 %v333, 2147483648
    %v343 = vsel %vm341, %v342, %v334
    %v344 = vsel %vm337, %v340, %v343
    %v345 = vsel %vm335, nan, %v344
    %v346 = vand.u32 2147483647, %v34
    %vm347 = vcmp.le.f32.partialorder %v346, 0.7853982
    %vm348 = vcmp.lt.s32.totalorder %v34, 0
    %v349 = vand.u32 %v34, 2139095040
    %v350 = vshrl.u32 %v349, 23
    %v351 = vsub.s32 %v350, 127
    %v352 = vand.u32 2147483647, %v34
    %v353 = vand.u32 %v352, 8388607
    %v354 = vor.u32 %v353, 8388608
    %v355 = vsub.s32 0, %v354
    %v356 = vadd.s32 %v351, 1
    %vm357 = vcmp.gt.s32.totalorder %v356, 0
    %v358 = vsel %vm357, %v356, 0
    %v359 = vshrl.u32 %v358, 5
    %v360 = vand.u32 %v358, 31
    %v361 = vsub.s32 32, %v360
    %v362 = vshrl.u32 683565275, %v361
    %v363 = vshll.u32 683565275, %v360
    %v364 = vshrl.u32 2475754826, %v361
    %v365 = vor.u32 %v363, %v364
    %v366 = vshll.u32 2475754826, %v360
    %v367 = vshrl.u32 2131351028, %v361
    %v368 = vor.u32 %v366, %v367
    %v369 = vshll.u32 2131351028, %v360
    %v370 = vshrl.u32 2102212464, %v361
    %v371 = vor.u32 %v369, %v370
    %v372 = vshll.u32 2102212464, %v360
    %v373 = vshrl.u32 920167782, %v361
    %v374 = vor.u32 %v372, %v373
    %v375 = vshll.u32 920167782, %v360
    %v376 = vshrl.u32 1326507024, %v361
    %v377 = vor.u32 %v375, %v376
    %vm378 = vcmp.lt.s32.totalorder %v359, 1
    %vm379 = vcmp.lt.s32.totalorder %v359, 2
    %vm380 = vcmp.lt.s32.totalorder %v359, 3
    %vm381 = vcmp.lt.s32.totalorder %v359, 4
    %v382 = vsel %vm378, %v362, %v365
    %v383 = vsel %vm381, %v371, 2102212464
    %v384 = vsel %vm380, %v368, %v383
    %v385 = vsel %vm379, %v382, %v384
    %v386 = vsel %vm378, %v365, %v368
    %v387 = vsel %vm381, %v374, 920167782
    %v388 = vsel %vm380, %v371, %v387
    %v389 = vsel %vm379, %v386, %v388
    %v390 = vsel %vm378, %v368, %v371
    %v391 = vsel %vm381, %v377, 1326507024
    %v392 = vsel %vm380, %v374, %v391
    %v393 = vsel %vm379, %v390, %v392
    %v394 = vshll.u32 %v354, 8
    %v395 = vmul.u32.u64.compose %v394, %v393
    %v396 = vextract.low.u32 %v395
    %v397 = vextract.high.u32 %v395
    %v398 = vmul.u32.u64.compose %v394, %v389
    %v399 = vextract.low.u32 %v398
    %v400 = vextract.high.u32 %v398
    %v401 = vmul.u32 %v394, %v385
    %v402 = vadd.s32 %v397, %v399
    %vm403 = vc.u32 %v397, %v399
    %v404 = vadd.s32 %v400, 1
    %v405 = vsel %vm403, %v404, %v400
    %v406 = vadd.s32 %v401, %v405
    %v407 = vadd.s32 %v406, 536870912
    %v408 = vshrl.u32 %v407, 30
    %v409 = vshll.u32 %v408, 30
    %v410 = vsub.s32 %v406, %v409
    %vm411 = vcmp.lt.s32.totalorder %v410, 0
    %v412 = vsub.s32 0, %v410
    %v413 = vsel %vm411, %v412, %v410
    %v414 = vclz %v413
    %v415 = vsub.s32 %v414, 2
    %vm416 = vcmp.gt.s32.totalorder 0, %v415
    %v417 = vsel %vm416, 0, %v415
    %v418 = vsub.s32 32, %v417
    %v419 = vshll.u32 %v410, %v417
    %v420 = vshrl.u32 %v402, %v418
    %v421 = vor.u32 %v419, %v420
    %v422 = vsub.s32 4294967266, %v417
    %v423 = vadd.s32 %v422, 127
    %v424 = vshll.u32 %v423, 23
    %v425 = vor.u32 4788187, %v424
    %v426 = vand.u32 2147483647, %v425
    %v428 = vcvt.s32.f32 %v421
    %v429 = vmul.f32 %v428, %v426
    %v430 = vxor.u32 %v429, 2147483648
    %v431 = vsel %vm348, %v430, %v429
    %v432 = vsub.s32 4, %v408
    %v433 = vsel %vm348, %v432, %v408
    %v434 = vsel %vm347, %v34, %v431
    %v435 = vsel %vm347, 0, %v433
    %v436 = vcosq.f32.pop %v434
    %v437 = vsinq.f32.pop %v434
    %vm438 = vweird.f32 %v34
    %v439 = vand.u32 %v435, 3
    %vm440 = vcmp.lt.s32.totalorder %v439, 2
    %vm441 = vcmp.eq.s32.totalorder %v439, 0
    %v442 = vxor.u32 %v437, 2147483648
    %v443 = vsel %vm441, %v436, %v442
    %vm444 = vcmp.eq.s32.totalorder %v439, 2
    %v445 = vxor.u32 %v436, 2147483648
    %v446 = vsel %vm444, %v445, %v437
    %v447 = vsel %vm440, %v443, %v446
    %v448 = vsel %vm438, nan, %v447
    %vm451 = vcmask 1040384
    %v452 = vrot.slane %v138, 7
    %v453 = vrot.slane %v242, 7
    %v454 = vsel %vm451, %v452, %v453
    %v460 = vrot.slane %v345, 7
    %v461 = vrot.slane %v448, 7
    %v462 = vsel %vm451, %v460, %v461
    %v466 = vsel %vm451, %v12, %v452
    %v467 = vsel %vm451, %v453, %v460
    %468 = vst [vmem:[#allocation2] sm:$0xff] %v466
    %469 = vst [vmem:[#allocation2 + $0x8] sm:$0xff] %v454
    %470 = vst [vmem:[#allocation2 + $0x10] sm:$0xff] %v467
    %471 = vst [vmem:[#allocation2 + $0x18] sm:$0xff] %v462
    %472 = vst [vmem:[#allocation2 + $0x20] sm:$0x1] %v461
    // Predicated region
    $region10: #{tpu_custom_call.1} parent=1 // pred_check
      _
    $region11: #{tpu_custom_call.1} parent=1 // pred_check_branch
      %474 = sbr.rel (0) target = $region13
    $region12: #{tpu_custom_call.1} parent=1 // pred_region
      %s476 = ssub.s32 640, 640
      %477 = vsyncadd [#allocation3], %s476
      %s478 = sshll.u32 [#allocation2], 4
      %s479 = int_to_ptr.vmem [resolvable:$true] %s478
      %484 = dma.vmem_to_hbm [thread:$0]  %s479, 640, %s2, [#allocation3], 128, 128, 8
    $region13: #{tpu_custom_call.1} parent=1 // pred_fallthru
      _
    // Predicated region
    $region14: #{tpu_custom_call.1} parent=1 // pred_check
      _
    $region15: #{tpu_custom_call.1} parent=1 // pred_check_branch
      %486 = sbr.rel (0) target = $region17
    $region16: #{tpu_custom_call.1} parent=1 // pred_region
      %487 = dma.done [#allocation3], 640
    $region17: #{tpu_custom_call.1} parent=1 // pred_fallthru
      _
    %488 = vsyncpa [#allocation3], 1

</llo_original>
